<compile_context>
chip_gen: v7x
topology: tpu7x:2x2x1
jax: 0.10.0
libtpu: 0.0.40
codegen_flags: <defaults>
</compile_context>

<pallas_src>
import functools

import jax
import jax.numpy as jnp
from jax.experimental import pallas as pl
from jax.experimental.pallas import tpu as pltpu


def _round_up(x, m):
    return -(-x // m) * m


def lstm_fc_kernel(ids_ref, w_ref, out_ref, *, B, T, V, Hp,
                   proj_off, hh_off, fc_off):
    """Fused embedding lookup + LSTM recurrence + fc + sigmoid (single program).

    ids_ref : (B, T)   int32  token ids
    w_ref   : (R, 4Hp) f32    packed weights:
                rows [proj_off, proj_off+V) : emb @ W_ih + b  (per-token gate preacts)
                rows [hh_off,   hh_off+Hp)  : W_hh (transposed, gate-padded)
                row  fc_off,  cols [0, Hp)  : fc weight
                row  fc_off+1, col 0        : fc bias
    out_ref : (B, 1)   f32    sigmoid(fc(h_T))
    """
    G = 4 * Hp

    ids = ids_ref[...]                                    # (B, T) int32
    proj = w_ref[proj_off:proj_off + V, :]                # (V, G)  f32
    w_hh = w_ref[hh_off:hh_off + Hp, :]                   # (Hp, G) f32
    w_fc = w_ref[fc_off:fc_off + 1, 0:Hp]                 # (1, Hp) f32
    b_fc = w_ref[fc_off + 1:fc_off + 2, 0:1]              # (1, 1)  f32

    # Fused embedding + input projection: x_t @ W_ih + b == proj[ids[:, t]].
    # Vocab is tiny, so the gather is V broadcast-selects per step.  These depend only
    # on ids/proj (not on h, c), so they sit off the serial recurrence chain.
    proj_rows = [proj[v:v + 1, :] for v in range(V)]      # each (1, G)
    xproj = []
    for t in range(T):
        ids_t = ids[:, t:t + 1]                           # (B, 1)
        xp = jnp.zeros((B, G), jnp.float32)
        for v in range(V):
            xp = jnp.where(ids_t == v, proj_rows[v], xp)
        xproj.append(xp)

    # Recurrent state lives in vregs; no per-step VMEM writeback.
    h = jnp.zeros((B, Hp), jnp.float32)
    c = jnp.zeros((B, Hp), jnp.float32)

    # T is a small static constant; full unroll keeps LLO scheduling visibility.
    for t in range(T):
        gates = xproj[t] + jnp.dot(h, w_hh, preferred_element_type=jnp.float32)  # (B, G)
        sig = jax.nn.sigmoid(gates)                       # one EUP pass over whole tile
        i_g = sig[:, 0 * Hp:1 * Hp]
        f_g = sig[:, 1 * Hp:2 * Hp]
        o_g = sig[:, 3 * Hp:4 * Hp]
        g_g = jnp.tanh(gates[:, 2 * Hp:3 * Hp])
        c = f_g * c + i_g * g_g
        h = o_g * jnp.tanh(c)

    # fc on the last hidden state then sigmoid (PyTorch: sigmoid(fc(x[:, -1, :]))).
    # Broadcast-multiply + lane reduction instead of a degenerate N=1 matmul.
    logits = jnp.sum(h * w_fc, axis=1, keepdims=True) + b_fc
    out_ref[...] = jax.nn.sigmoid(logits)


def init_params(key, vocab_size, embedding_dim=16, hidden_dim=16):
    """Deterministic synthetic parameters matching nn.Embedding / nn.LSTM / nn.Linear."""
    ks = jax.random.split(key, 7)
    scale = 1.0 / jnp.sqrt(hidden_dim)
    emb = jax.random.normal(ks[0], (vocab_size, embedding_dim), jnp.float32)
    # PyTorch stores weight_ih_l0 as (4H, E); we keep the transposed (E, 4H) layout.
    w_ih_t = jax.random.uniform(ks[1], (embedding_dim, 4 * hidden_dim), jnp.float32,
                                -scale, scale)
    w_hh_t = jax.random.uniform(ks[2], (hidden_dim, 4 * hidden_dim), jnp.float32,
                                -scale, scale)
    b_ih = jax.random.uniform(ks[3], (4 * hidden_dim,), jnp.float32, -scale, scale)
    b_hh = jax.random.uniform(ks[4], (4 * hidden_dim,), jnp.float32, -scale, scale)
    w_fc = jax.random.uniform(ks[5], (hidden_dim, 1), jnp.float32, -scale, scale)
    b_fc = jax.random.uniform(ks[6], (1, 1), jnp.float32, -scale, scale)
    return {"embedding": emb, "w_ih_t": w_ih_t, "w_hh_t": w_hh_t,
            "b_ih": b_ih, "b_hh": b_hh, "w_fc": w_fc, "b_fc": b_fc}


def _pad_gate_cols(w, H, Hp):
    """Zero-pad each of the 4 PyTorch gate blocks (i, f, g, o) along the 4H axis to Hp."""
    lead = w.shape[:-1]
    w4 = w.reshape(*lead, 4, H)
    w4 = jnp.pad(w4, [(0, 0)] * len(lead) + [(0, 0), (0, Hp - H)])
    return w4.reshape(*lead, 4 * Hp)


def prepare_params(params):
    """One-time weight preprocessing: gate padding, Embedding+W_ih+bias fusion, packing.

    Zero gate-padding is numerically exact: padded gate columns get i=f=o=sigmoid(0)=0.5,
    g=tanh(0)=0, so padded c/h lanes stay exactly 0 and padded fc columns contribute 0.
    Returns (packed_weights, meta) so the per-call forward is nothing but the pallas_call.
    """
    V, _E = params["embedding"].shape
    H = params["w_hh_t"].shape[0]
    Hp = _round_up(H, 32)                    # 4*Hp multiple of 128 -> lane-aligned gates
    G = 4 * Hp

    b = (params["b_ih"] + params["b_hh"]).reshape(1, 4 * H)

    # Fuse Embedding + input projection + bias into a per-token table.
    proj = params["embedding"] @ params["w_ih_t"] + b           # (V, 4H)
    proj = _pad_gate_cols(proj, H, Hp)                          # (V, G)

    w_hh = _pad_gate_cols(params["w_hh_t"], H, Hp)              # (H, G)
    w_hh = jnp.pad(w_hh, ((0, Hp - H), (0, 0)))                 # (Hp, G)

    proj_off = 0
    hh_off = _round_up(V, 8)                 # 8-sublane-aligned section starts
    fc_off = hh_off + _round_up(Hp, 8)
    n_rows = fc_off + 8

    w = jnp.zeros((n_rows, G), jnp.float32)
    w = w.at[proj_off:proj_off + V, :].set(proj)
    w = w.at[hh_off:hh_off + Hp, :].set(w_hh)
    w = w.at[fc_off, :Hp].set(jnp.pad(params["w_fc"][:, 0], (0, Hp - H)))
    w = w.at[fc_off + 1, 0].set(params["b_fc"][0, 0])

    meta = {"V": V, "Hp": Hp, "proj_off": proj_off, "hh_off": hh_off, "fc_off": fc_off}
    return jax.device_put(w), meta


def make_forward(meta):
    """Build the jitted forward: per call, only the pallas_call runs (no wrapper XLA ops)."""
    V, Hp = meta["V"], meta["Hp"]
    proj_off, hh_off, fc_off = meta["proj_off"], meta["hh_off"], meta["fc_off"]
    G = 4 * Hp

    def forward(x_ids, packed_weights):
        B, T = x_ids.shape
        kernel = functools.partial(
            lstm_fc_kernel, B=B, T=T, V=V, Hp=Hp,
            proj_off=proj_off, hh_off=hh_off, fc_off=fc_off)

        flops = T * (2 * B * Hp * G) + 2 * B * Hp
        transcendentals = T * (B * G + 2 * B * Hp) + B
        bytes_accessed = int(x_ids.size * 4
                             + packed_weights.size * packed_weights.dtype.itemsize
                             + B * 4)

        # Single program; operands tiny and fully VMEM-resident (block == full array,
        # so the (8,128) tiling constraint does not apply).
        return pl.pallas_call(
            kernel,
            out_shape=jax.ShapeDtypeStruct((B, 1), jnp.float32),
            in_specs=[pl.BlockSpec(memory_space=pltpu.MemorySpace.VMEM)] * 2,
            out_specs=pl.BlockSpec(memory_space=pltpu.MemorySpace.VMEM),
            cost_estimate=pl.CostEstimate(flops=flops,
                                          transcendentals=transcendentals,
                                          bytes_accessed=bytes_accessed),
        )(x_ids.astype(jnp.int32), packed_weights)

    return jax.jit(forward)


def reference_forward(x_ids, params):
    """Pure-JAX float32 reference matching the PyTorch module (for tolerance check)."""
    emb = jnp.take(params["embedding"], x_ids, axis=0)          # (B, T, E)
    B, T, _E = emb.shape
    H = params["w_hh_t"].shape[0]
    b = params["b_ih"] + params["b_hh"]
    h = jnp.zeros((B, H), jnp.float32)
    c = jnp.zeros((B, H), jnp.float32)
    for t in range(T):
        gates = emb[:, t, :] @ params["w_ih_t"] + h @ params["w_hh_t"] + b
        i_g, f_g, g_g, o_g = jnp.split(gates, 4, axis=1)        # PyTorch gate order
        i_g, f_g, o_g = jax.nn.sigmoid(i_g), jax.nn.sigmoid(f_g), jax.nn.sigmoid(o_g)
        g_g = jnp.tanh(g_g)
        c = f_g * c + i_g * g_g
        h = o_g * jnp.tanh(c)
    return jax.nn.sigmoid(h @ params["w_fc"] + params["b_fc"])


if __name__ == "__main__":
    # Module defaults: vocab_size = len({'<PAD>':0, '<UNK>':1}) = 2,
    # embedding_dim = hidden_dim = 16.
    vocab_size = 2
    embedding_dim = 16
    hidden_dim = 16
    batch, seq_len = 2, 8

    key = jax.random.PRNGKey(0)
    pkey, xkey = jax.random.split(key)
    params = init_params(pkey, vocab_size, embedding_dim, hidden_dim)
    x_ids = jax.random.randint(xkey, (batch, seq_len), 0, vocab_size, dtype=jnp.int32)

    packed_weights, meta = prepare_params(params)   # one-time prep (off the per-call path)
    forward = make_forward(meta)

    out = forward(x_ids, packed_weights)
    out = jax.block_until_ready(out)
    assert out.shape == (batch, 1)

    ref = reference_forward(x_ids, params)
    assert bool(jnp.allclose(out, ref, atol=2e-4, rtol=2e-4)), (out, ref)
    assert bool(jnp.all((out >= 0.0) & (out <= 1.0)))
    print("KERNEL_OK")
</pallas_src>

<mosaic_0001>
module attributes {stable_mosaic.version = 11 : i64} {
  func.func @lstm_fc_kernel(%arg0: memref<2x8xi32, #tpu.memory_space<vmem>>, %arg1: memref<48x128xf32, #tpu.memory_space<vmem>>, %arg2: memref<2x1xf32, #tpu.memory_space<vmem>>) attributes {dimension_semantics = [], scalar_prefetch = 0 : i64, scratch_operands = 0 : i64, tpu.core_type = #tpu.core_type<tc>} {
    %c0 = arith.constant 0 : index
    %c0_0 = arith.constant 0 : index
    %0 = vector.load %arg0[%c0, %c0_0] : memref<2x8xi32, #tpu.memory_space<vmem>>, vector<2x8xi32>
    %c0_1 = arith.constant 0 : index
    %c0_2 = arith.constant 0 : index
    %1 = vector.load %arg1[%c0_1, %c0_2] : memref<48x128xf32, #tpu.memory_space<vmem>>, vector<2x128xf32>
    %c8 = arith.constant 8 : index
    %c0_3 = arith.constant 0 : index
    %2 = vector.load %arg1[%c8, %c0_3] : memref<48x128xf32, #tpu.memory_space<vmem>>, vector<32x128xf32>
    %c40 = arith.constant 40 : index
    %c0_4 = arith.constant 0 : index
    %3 = vector.load %arg1[%c40, %c0_4] : memref<48x128xf32, #tpu.memory_space<vmem>>, vector<1x32xf32>
    %c41 = arith.constant 41 : index
    %c0_5 = arith.constant 0 : index
    %4 = vector.load %arg1[%c41, %c0_5] : memref<48x128xf32, #tpu.memory_space<vmem>>, vector<1x1xf32>
    %5 = vector.extract_strided_slice %1 {offsets = [0, 0], sizes = [1, 128], strides = [1, 1]} : vector<2x128xf32> to vector<1x128xf32>
    %6 = vector.extract_strided_slice %1 {offsets = [1, 0], sizes = [1, 128], strides = [1, 1]} : vector<2x128xf32> to vector<1x128xf32>
    %7 = vector.extract_strided_slice %0 {offsets = [0, 0], sizes = [2, 1], strides = [1, 1]} : vector<2x8xi32> to vector<2x1xi32>
    %cst = arith.constant 0.000000e+00 : f32
    %8 = vector.broadcast %cst : f32 to vector<2x128xf32>
    %c0_i32 = arith.constant 0 : i32
    %9 = vector.broadcast %c0_i32 : i32 to vector<2x1xi32>
    %10 = arith.cmpi eq, %7, %9 : vector<2x1xi32>
    %11 = vector.shape_cast %10 : vector<2x1xi1> to vector<2x1xi1>
    %12 = vector.broadcast %11 : vector<2x1xi1> to vector<2x128xi1>
    %13 = vector.shape_cast %5 : vector<1x128xf32> to vector<1x128xf32>
    %14 = vector.broadcast %13 : vector<1x128xf32> to vector<2x128xf32>
    %15 = arith.select %12, %14, %8 : vector<2x128xi1>, vector<2x128xf32>
    %c1_i32 = arith.constant 1 : i32
    %16 = vector.broadcast %c1_i32 : i32 to vector<2x1xi32>
    %17 = arith.cmpi eq, %7, %16 : vector<2x1xi32>
    %18 = vector.shape_cast %17 : vector<2x1xi1> to vector<2x1xi1>
    %19 = vector.broadcast %18 : vector<2x1xi1> to vector<2x128xi1>
    %20 = vector.shape_cast %6 : vector<1x128xf32> to vector<1x128xf32>
    %21 = vector.broadcast %20 : vector<1x128xf32> to vector<2x128xf32>
    %22 = arith.select %19, %21, %15 : vector<2x128xi1>, vector<2x128xf32>
    %23 = vector.extract_strided_slice %0 {offsets = [0, 1], sizes = [2, 1], strides = [1, 1]} : vector<2x8xi32> to vector<2x1xi32>
    %cst_6 = arith.constant 0.000000e+00 : f32
    %24 = vector.broadcast %cst_6 : f32 to vector<2x128xf32>
    %c0_i32_7 = arith.constant 0 : i32
    %25 = vector.broadcast %c0_i32_7 : i32 to vector<2x1xi32>
    %26 = arith.cmpi eq, %23, %25 : vector<2x1xi32>
    %27 = vector.shape_cast %26 : vector<2x1xi1> to vector<2x1xi1>
    %28 = vector.broadcast %27 : vector<2x1xi1> to vector<2x128xi1>
    %29 = vector.shape_cast %5 : vector<1x128xf32> to vector<1x128xf32>
    %30 = vector.broadcast %29 : vector<1x128xf32> to vector<2x128xf32>
    %31 = arith.select %28, %30, %24 : vector<2x128xi1>, vector<2x128xf32>
    %c1_i32_8 = arith.constant 1 : i32
    %32 = vector.broadcast %c1_i32_8 : i32 to vector<2x1xi32>
    %33 = arith.cmpi eq, %23, %32 : vector<2x1xi32>
    %34 = vector.shape_cast %33 : vector<2x1xi1> to vector<2x1xi1>
    %35 = vector.broadcast %34 : vector<2x1xi1> to vector<2x128xi1>
    %36 = vector.shape_cast %6 : vector<1x128xf32> to vector<1x128xf32>
    %37 = vector.broadcast %36 : vector<1x128xf32> to vector<2x128xf32>
    %38 = arith.select %35, %37, %31 : vector<2x128xi1>, vector<2x128xf32>
    %39 = vector.extract_strided_slice %0 {offsets = [0, 2], sizes = [2, 1], strides = [1, 1]} : vector<2x8xi32> to vector<2x1xi32>
    %cst_9 = arith.constant 0.000000e+00 : f32
    %40 = vector.broadcast %cst_9 : f32 to vector<2x128xf32>
    %c0_i32_10 = arith.constant 0 : i32
    %41 = vector.broadcast %c0_i32_10 : i32 to vector<2x1xi32>
    %42 = arith.cmpi eq, %39, %41 : vector<2x1xi32>
    %43 = vector.shape_cast %42 : vector<2x1xi1> to vector<2x1xi1>
    %44 = vector.broadcast %43 : vector<2x1xi1> to vector<2x128xi1>
    %45 = vector.shape_cast %5 : vector<1x128xf32> to vector<1x128xf32>
    %46 = vector.broadcast %45 : vector<1x128xf32> to vector<2x128xf32>
    %47 = arith.select %44, %46, %40 : vector<2x128xi1>, vector<2x128xf32>
    %c1_i32_11 = arith.constant 1 : i32
    %48 = vector.broadcast %c1_i32_11 : i32 to vector<2x1xi32>
    %49 = arith.cmpi eq, %39, %48 : vector<2x1xi32>
    %50 = vector.shape_cast %49 : vector<2x1xi1> to vector<2x1xi1>
    %51 = vector.broadcast %50 : vector<2x1xi1> to vector<2x128xi1>
    %52 = vector.shape_cast %6 : vector<1x128xf32> to vector<1x128xf32>
    %53 = vector.broadcast %52 : vector<1x128xf32> to vector<2x128xf32>
    %54 = arith.select %51, %53, %47 : vector<2x128xi1>, vector<2x128xf32>
    %55 = vector.extract_strided_slice %0 {offsets = [0, 3], sizes = [2, 1], strides = [1, 1]} : vector<2x8xi32> to vector<2x1xi32>
    %cst_12 = arith.constant 0.000000e+00 : f32
    %56 = vector.broadcast %cst_12 : f32 to vector<2x128xf32>
    %c0_i32_13 = arith.constant 0 : i32
    %57 = vector.broadcast %c0_i32_13 : i32 to vector<2x1xi32>
    %58 = arith.cmpi eq, %55, %57 : vector<2x1xi32>
    %59 = vector.shape_cast %58 : vector<2x1xi1> to vector<2x1xi1>
    %60 = vector.broadcast %59 : vector<2x1xi1> to vector<2x128xi1>
    %61 = vector.shape_cast %5 : vector<1x128xf32> to vector<1x128xf32>
    %62 = vector.broadcast %61 : vector<1x128xf32> to vector<2x128xf32>
    %63 = arith.select %60, %62, %56 : vector<2x128xi1>, vector<2x128xf32>
    %c1_i32_14 = arith.constant 1 : i32
    %64 = vector.broadcast %c1_i32_14 : i32 to vector<2x1xi32>
    %65 = arith.cmpi eq, %55, %64 : vector<2x1xi32>
    %66 = vector.shape_cast %65 : vector<2x1xi1> to vector<2x1xi1>
    %67 = vector.broadcast %66 : vector<2x1xi1> to vector<2x128xi1>
    %68 = vector.shape_cast %6 : vector<1x128xf32> to vector<1x128xf32>
    %69 = vector.broadcast %68 : vector<1x128xf32> to vector<2x128xf32>
    %70 = arith.select %67, %69, %63 : vector<2x128xi1>, vector<2x128xf32>
    %71 = vector.extract_strided_slice %0 {offsets = [0, 4], sizes = [2, 1], strides = [1, 1]} : vector<2x8xi32> to vector<2x1xi32>
    %cst_15 = arith.constant 0.000000e+00 : f32
    %72 = vector.broadcast %cst_15 : f32 to vector<2x128xf32>
    %c0_i32_16 = arith.constant 0 : i32
    %73 = vector.broadcast %c0_i32_16 : i32 to vector<2x1xi32>
    %74 = arith.cmpi eq, %71, %73 : vector<2x1xi32>
    %75 = vector.shape_cast %74 : vector<2x1xi1> to vector<2x1xi1>
    %76 = vector.broadcast %75 : vector<2x1xi1> to vector<2x128xi1>
    %77 = vector.shape_cast %5 : vector<1x128xf32> to vector<1x128xf32>
    %78 = vector.broadcast %77 : vector<1x128xf32> to vector<2x128xf32>
    %79 = arith.select %76, %78, %72 : vector<2x128xi1>, vector<2x128xf32>
    %c1_i32_17 = arith.constant 1 : i32
    %80 = vector.broadcast %c1_i32_17 : i32 to vector<2x1xi32>
    %81 = arith.cmpi eq, %71, %80 : vector<2x1xi32>
    %82 = vector.shape_cast %81 : vector<2x1xi1> to vector<2x1xi1>
    %83 = vector.broadcast %82 : vector<2x1xi1> to vector<2x128xi1>
    %84 = vector.shape_cast %6 : vector<1x128xf32> to vector<1x128xf32>
    %85 = vector.broadcast %84 : vector<1x128xf32> to vector<2x128xf32>
    %86 = arith.select %83, %85, %79 : vector<2x128xi1>, vector<2x128xf32>
    %87 = vector.extract_strided_slice %0 {offsets = [0, 5], sizes = [2, 1], strides = [1, 1]} : vector<2x8xi32> to vector<2x1xi32>
    %cst_18 = arith.constant 0.000000e+00 : f32
    %88 = vector.broadcast %cst_18 : f32 to vector<2x128xf32>
    %c0_i32_19 = arith.constant 0 : i32
    %89 = vector.broadcast %c0_i32_19 : i32 to vector<2x1xi32>
    %90 = arith.cmpi eq, %87, %89 : vector<2x1xi32>
    %91 = vector.shape_cast %90 : vector<2x1xi1> to vector<2x1xi1>
    %92 = vector.broadcast %91 : vector<2x1xi1> to vector<2x128xi1>
    %93 = vector.shape_cast %5 : vector<1x128xf32> to vector<1x128xf32>
    %94 = vector.broadcast %93 : vector<1x128xf32> to vector<2x128xf32>
    %95 = arith.select %92, %94, %88 : vector<2x128xi1>, vector<2x128xf32>
    %c1_i32_20 = arith.constant 1 : i32
    %96 = vector.broadcast %c1_i32_20 : i32 to vector<2x1xi32>
    %97 = arith.cmpi eq, %87, %96 : vector<2x1xi32>
    %98 = vector.shape_cast %97 : vector<2x1xi1> to vector<2x1xi1>
    %99 = vector.broadcast %98 : vector<2x1xi1> to vector<2x128xi1>
    %100 = vector.shape_cast %6 : vector<1x128xf32> to vector<1x128xf32>
    %101 = vector.broadcast %100 : vector<1x128xf32> to vector<2x128xf32>
    %102 = arith.select %99, %101, %95 : vector<2x128xi1>, vector<2x128xf32>
    %103 = vector.extract_strided_slice %0 {offsets = [0, 6], sizes = [2, 1], strides = [1, 1]} : vector<2x8xi32> to vector<2x1xi32>
    %cst_21 = arith.constant 0.000000e+00 : f32
    %104 = vector.broadcast %cst_21 : f32 to vector<2x128xf32>
    %c0_i32_22 = arith.constant 0 : i32
    %105 = vector.broadcast %c0_i32_22 : i32 to vector<2x1xi32>
    %106 = arith.cmpi eq, %103, %105 : vector<2x1xi32>
    %107 = vector.shape_cast %106 : vector<2x1xi1> to vector<2x1xi1>
    %108 = vector.broadcast %107 : vector<2x1xi1> to vector<2x128xi1>
    %109 = vector.shape_cast %5 : vector<1x128xf32> to vector<1x128xf32>
    %110 = vector.broadcast %109 : vector<1x128xf32> to vector<2x128xf32>
    %111 = arith.select %108, %110, %104 : vector<2x128xi1>, vector<2x128xf32>
    %c1_i32_23 = arith.constant 1 : i32
    %112 = vector.broadcast %c1_i32_23 : i32 to vector<2x1xi32>
    %113 = arith.cmpi eq, %103, %112 : vector<2x1xi32>
    %114 = vector.shape_cast %113 : vector<2x1xi1> to vector<2x1xi1>
    %115 = vector.broadcast %114 : vector<2x1xi1> to vector<2x128xi1>
    %116 = vector.shape_cast %6 : vector<1x128xf32> to vector<1x128xf32>
    %117 = vector.broadcast %116 : vector<1x128xf32> to vector<2x128xf32>
    %118 = arith.select %115, %117, %111 : vector<2x128xi1>, vector<2x128xf32>
    %119 = vector.extract_strided_slice %0 {offsets = [0, 7], sizes = [2, 1], strides = [1, 1]} : vector<2x8xi32> to vector<2x1xi32>
    %cst_24 = arith.constant 0.000000e+00 : f32
    %120 = vector.broadcast %cst_24 : f32 to vector<2x128xf32>
    %c0_i32_25 = arith.constant 0 : i32
    %121 = vector.broadcast %c0_i32_25 : i32 to vector<2x1xi32>
    %122 = arith.cmpi eq, %119, %121 : vector<2x1xi32>
    %123 = vector.shape_cast %122 : vector<2x1xi1> to vector<2x1xi1>
    %124 = vector.broadcast %123 : vector<2x1xi1> to vector<2x128xi1>
    %125 = vector.shape_cast %5 : vector<1x128xf32> to vector<1x128xf32>
    %126 = vector.broadcast %125 : vector<1x128xf32> to vector<2x128xf32>
    %127 = arith.select %124, %126, %120 : vector<2x128xi1>, vector<2x128xf32>
    %c1_i32_26 = arith.constant 1 : i32
    %128 = vector.broadcast %c1_i32_26 : i32 to vector<2x1xi32>
    %129 = arith.cmpi eq, %119, %128 : vector<2x1xi32>
    %130 = vector.shape_cast %129 : vector<2x1xi1> to vector<2x1xi1>
    %131 = vector.broadcast %130 : vector<2x1xi1> to vector<2x128xi1>
    %132 = vector.shape_cast %6 : vector<1x128xf32> to vector<1x128xf32>
    %133 = vector.broadcast %132 : vector<1x128xf32> to vector<2x128xf32>
    %134 = arith.select %131, %133, %127 : vector<2x128xi1>, vector<2x128xf32>
    %cst_27 = arith.constant 0.000000e+00 : f32
    %135 = vector.broadcast %cst_27 : f32 to vector<2x32xf32>
    %cst_28 = arith.constant 0.000000e+00 : f32
    %136 = vector.broadcast %cst_28 : f32 to vector<2x32xf32>
    %cst_29 = arith.constant dense<0.000000e+00> : vector<2x128xf32>
    %137 = tpu.matmul %135, %2, %cst_29 {dimension_numbers = #tpu.dot_dimension_numbers<[1], [0], [0], [1], [0, 0, 1, 1], [], []>} : vector<2x32xf32>, vector<32x128xf32>, vector<2x128xf32> -> vector<2x128xf32>
    %138 = arith.addf %22, %137 : vector<2x128xf32>
    %139 = arith.negf %138 : vector<2x128xf32>
    %140 = math.exp %139 : vector<2x128xf32>
    %cst_30 = arith.constant 1.000000e+00 : f32
    %141 = vector.broadcast %cst_30 : f32 to vector<2x128xf32>
    %142 = arith.addf %141, %140 : vector<2x128xf32>
    %143 = arith.divf %141, %142 : vector<2x128xf32>
    %144 = vector.extract_strided_slice %143 {offsets = [0, 0], sizes = [2, 32], strides = [1, 1]} : vector<2x128xf32> to vector<2x32xf32>
    %145 = vector.extract_strided_slice %143 {offsets = [0, 32], sizes = [2, 32], strides = [1, 1]} : vector<2x128xf32> to vector<2x32xf32>
    %146 = vector.extract_strided_slice %143 {offsets = [0, 96], sizes = [2, 32], strides = [1, 1]} : vector<2x128xf32> to vector<2x32xf32>
    %147 = vector.extract_strided_slice %138 {offsets = [0, 64], sizes = [2, 32], strides = [1, 1]} : vector<2x128xf32> to vector<2x32xf32>
    %148 = math.tanh %147 : vector<2x32xf32>
    %149 = arith.mulf %145, %136 : vector<2x32xf32>
    %150 = arith.mulf %144, %148 : vector<2x32xf32>
    %151 = arith.addf %149, %150 : vector<2x32xf32>
    %152 = math.tanh %151 : vector<2x32xf32>
    %153 = arith.mulf %146, %152 : vector<2x32xf32>
    %cst_31 = arith.constant dense<0.000000e+00> : vector<2x128xf32>
    %154 = tpu.matmul %153, %2, %cst_31 {dimension_numbers = #tpu.dot_dimension_numbers<[1], [0], [0], [1], [0, 0, 1, 1], [], []>} : vector<2x32xf32>, vector<32x128xf32>, vector<2x128xf32> -> vector<2x128xf32>
    %155 = arith.addf %38, %154 : vector<2x128xf32>
    %156 = arith.negf %155 : vector<2x128xf32>
    %157 = math.exp %156 : vector<2x128xf32>
    %cst_32 = arith.constant 1.000000e+00 : f32
    %158 = vector.broadcast %cst_32 : f32 to vector<2x128xf32>
    %159 = arith.addf %158, %157 : vector<2x128xf32>
    %160 = arith.divf %158, %159 : vector<2x128xf32>
    %161 = vector.extract_strided_slice %160 {offsets = [0, 0], sizes = [2, 32], strides = [1, 1]} : vector<2x128xf32> to vector<2x32xf32>
    %162 = vector.extract_strided_slice %160 {offsets = [0, 32], sizes = [2, 32], strides = [1, 1]} : vector<2x128xf32> to vector<2x32xf32>
    %163 = vector.extract_strided_slice %160 {offsets = [0, 96], sizes = [2, 32], strides = [1, 1]} : vector<2x128xf32> to vector<2x32xf32>
    %164 = vector.extract_strided_slice %155 {offsets = [0, 64], sizes = [2, 32], strides = [1, 1]} : vector<2x128xf32> to vector<2x32xf32>
    %165 = math.tanh %164 : vector<2x32xf32>
    %166 = arith.mulf %162, %151 : vector<2x32xf32>
    %167 = arith.mulf %161, %165 : vector<2x32xf32>
    %168 = arith.addf %166, %167 : vector<2x32xf32>
    %169 = math.tanh %168 : vector<2x32xf32>
    %170 = arith.mulf %163, %169 : vector<2x32xf32>
    %cst_33 = arith.constant dense<0.000000e+00> : vector<2x128xf32>
    %171 = tpu.matmul %170, %2, %cst_33 {dimension_numbers = #tpu.dot_dimension_numbers<[1], [0], [0], [1], [0, 0, 1, 1], [], []>} : vector<2x32xf32>, vector<32x128xf32>, vector<2x128xf32> -> vector<2x128xf32>
    %172 = arith.addf %54, %171 : vector<2x128xf32>
    %173 = arith.negf %172 : vector<2x128xf32>
    %174 = math.exp %173 : vector<2x128xf32>
    %cst_34 = arith.constant 1.000000e+00 : f32
    %175 = vector.broadcast %cst_34 : f32 to vector<2x128xf32>
    %176 = arith.addf %175, %174 : vector<2x128xf32>
    %177 = arith.divf %175, %176 : vector<2x128xf32>
    %178 = vector.extract_strided_slice %177 {offsets = [0, 0], sizes = [2, 32], strides = [1, 1]} : vector<2x128xf32> to vector<2x32xf32>
    %179 = vector.extract_strided_slice %177 {offsets = [0, 32], sizes = [2, 32], strides = [1, 1]} : vector<2x128xf32> to vector<2x32xf32>
    %180 = vector.extract_strided_slice %177 {offsets = [0, 96], sizes = [2, 32], strides = [1, 1]} : vector<2x128xf32> to vector<2x32xf32>
    %181 = vector.extract_strided_slice %172 {offsets = [0, 64], sizes = [2, 32], strides = [1, 1]} : vector<2x128xf32> to vector<2x32xf32>
    %182 = math.tanh %181 : vector<2x32xf32>
    %183 = arith.mulf %179, %168 : vector<2x32xf32>
    %184 = arith.mulf %178, %182 : vector<2x32xf32>
    %185 = arith.addf %183, %184 : vector<2x32xf32>
    %186 = math.tanh %185 : vector<2x32xf32>
    %187 = arith.mulf %180, %186 : vector<2x32xf32>
    %cst_35 = arith.constant dense<0.000000e+00> : vector<2x128xf32>
    %188 = tpu.matmul %187, %2, %cst_35 {dimension_numbers = #tpu.dot_dimension_numbers<[1], [0], [0], [1], [0, 0, 1, 1], [], []>} : vector<2x32xf32>, vector<32x128xf32>, vector<2x128xf32> -> vector<2x128xf32>
    %189 = arith.addf %70, %188 : vector<2x128xf32>
    %190 = arith.negf %189 : vector<2x128xf32>
    %191 = math.exp %190 : vector<2x128xf32>
    %cst_36 = arith.constant 1.000000e+00 : f32
    %192 = vector.broadcast %cst_36 : f32 to vector<2x128xf32>
    %193 = arith.addf %192, %191 : vector<2x128xf32>
    %194 = arith.divf %192, %193 : vector<2x128xf32>
    %195 = vector.extract_strided_slice %194 {offsets = [0, 0], sizes = [2, 32], strides = [1, 1]} : vector<2x128xf32> to vector<2x32xf32>
    %196 = vector.extract_strided_slice %194 {offsets = [0, 32], sizes = [2, 32], strides = [1, 1]} : vector<2x128xf32> to vector<2x32xf32>
    %197 = vector.extract_strided_slice %194 {offsets = [0, 96], sizes = [2, 32], strides = [1, 1]} : vector<2x128xf32> to vector<2x32xf32>
    %198 = vector.extract_strided_slice %189 {offsets = [0, 64], sizes = [2, 32], strides = [1, 1]} : vector<2x128xf32> to vector<2x32xf32>
    %199 = math.tanh %198 : vector<2x32xf32>
    %200 = arith.mulf %196, %185 : vector<2x32xf32>
    %201 = arith.mulf %195, %199 : vector<2x32xf32>
    %202 = arith.addf %200, %201 : vector<2x32xf32>
    %203 = math.tanh %202 : vector<2x32xf32>
    %204 = arith.mulf %197, %203 : vector<2x32xf32>
    %cst_37 = arith.constant dense<0.000000e+00> : vector<2x128xf32>
    %205 = tpu.matmul %204, %2, %cst_37 {dimension_numbers = #tpu.dot_dimension_numbers<[1], [0], [0], [1], [0, 0, 1, 1], [], []>} : vector<2x32xf32>, vector<32x128xf32>, vector<2x128xf32> -> vector<2x128xf32>
    %206 = arith.addf %86, %205 : vector<2x128xf32>
    %207 = arith.negf %206 : vector<2x128xf32>
    %208 = math.exp %207 : vector<2x128xf32>
    %cst_38 = arith.constant 1.000000e+00 : f32
    %209 = vector.broadcast %cst_38 : f32 to vector<2x128xf32>
    %210 = arith.addf %209, %208 : vector<2x128xf32>
    %211 = arith.divf %209, %210 : vector<2x128xf32>
    %212 = vector.extract_strided_slice %211 {offsets = [0, 0], sizes = [2, 32], strides = [1, 1]} : vector<2x128xf32> to vector<2x32xf32>
    %213 = vector.extract_strided_slice %211 {offsets = [0, 32], sizes = [2, 32], strides = [1, 1]} : vector<2x128xf32> to vector<2x32xf32>
    %214 = vector.extract_strided_slice %211 {offsets = [0, 96], sizes = [2, 32], strides = [1, 1]} : vector<2x128xf32> to vector<2x32xf32>
    %215 = vector.extract_strided_slice %206 {offsets = [0, 64], sizes = [2, 32], strides = [1, 1]} : vector<2x128xf32> to vector<2x32xf32>
    %216 = math.tanh %215 : vector<2x32xf32>
    %217 = arith.mulf %213, %202 : vector<2x32xf32>
    %218 = arith.mulf %212, %216 : vector<2x32xf32>
    %219 = arith.addf %217, %218 : vector<2x32xf32>
    %220 = math.tanh %219 : vector<2x32xf32>
    %221 = arith.mulf %214, %220 : vector<2x32xf32>
    %cst_39 = arith.constant dense<0.000000e+00> : vector<2x128xf32>
    %222 = tpu.matmul %221, %2, %cst_39 {dimension_numbers = #tpu.dot_dimension_numbers<[1], [0], [0], [1], [0, 0, 1, 1], [], []>} : vector<2x32xf32>, vector<32x128xf32>, vector<2x128xf32> -> vector<2x128xf32>
    %223 = arith.addf %102, %222 : vector<2x128xf32>
    %224 = arith.negf %223 : vector<2x128xf32>
    %225 = math.exp %224 : vector<2x128xf32>
    %cst_40 = arith.constant 1.000000e+00 : f32
    %226 = vector.broadcast %cst_40 : f32 to vector<2x128xf32>
    %227 = arith.addf %226, %225 : vector<2x128xf32>
    %228 = arith.divf %226, %227 : vector<2x128xf32>
    %229 = vector.extract_strided_slice %228 {offsets = [0, 0], sizes = [2, 32], strides = [1, 1]} : vector<2x128xf32> to vector<2x32xf32>
    %230 = vector.extract_strided_slice %228 {offsets = [0, 32], sizes = [2, 32], strides = [1, 1]} : vector<2x128xf32> to vector<2x32xf32>
    %231 = vector.extract_strided_slice %228 {offsets = [0, 96], sizes = [2, 32], strides = [1, 1]} : vector<2x128xf32> to vector<2x32xf32>
    %232 = vector.extract_strided_slice %223 {offsets = [0, 64], sizes = [2, 32], strides = [1, 1]} : vector<2x128xf32> to vector<2x32xf32>
    %233 = math.tanh %232 : vector<2x32xf32>
    %234 = arith.mulf %230, %219 : vector<2x32xf32>
    %235 = arith.mulf %229, %233 : vector<2x32xf32>
    %236 = arith.addf %234, %235 : vector<2x32xf32>
    %237 = math.tanh %236 : vector<2x32xf32>
    %238 = arith.mulf %231, %237 : vector<2x32xf32>
    %cst_41 = arith.constant dense<0.000000e+00> : vector<2x128xf32>
    %239 = tpu.matmul %238, %2, %cst_41 {dimension_numbers = #tpu.dot_dimension_numbers<[1], [0], [0], [1], [0, 0, 1, 1], [], []>} : vector<2x32xf32>, vector<32x128xf32>, vector<2x128xf32> -> vector<2x128xf32>
    %240 = arith.addf %118, %239 : vector<2x128xf32>
    %241 = arith.negf %240 : vector<2x128xf32>
    %242 = math.exp %241 : vector<2x128xf32>
    %cst_42 = arith.constant 1.000000e+00 : f32
    %243 = vector.broadcast %cst_42 : f32 to vector<2x128xf32>
    %244 = arith.addf %243, %242 : vector<2x128xf32>
    %245 = arith.divf %243, %244 : vector<2x128xf32>
    %246 = vector.extract_strided_slice %245 {offsets = [0, 0], sizes = [2, 32], strides = [1, 1]} : vector<2x128xf32> to vector<2x32xf32>
    %247 = vector.extract_strided_slice %245 {offsets = [0, 32], sizes = [2, 32], strides = [1, 1]} : vector<2x128xf32> to vector<2x32xf32>
    %248 = vector.extract_strided_slice %245 {offsets = [0, 96], sizes = [2, 32], strides = [1, 1]} : vector<2x128xf32> to vector<2x32xf32>
    %249 = vector.extract_strided_slice %240 {offsets = [0, 64], sizes = [2, 32], strides = [1, 1]} : vector<2x128xf32> to vector<2x32xf32>
    %250 = math.tanh %249 : vector<2x32xf32>
    %251 = arith.mulf %247, %236 : vector<2x32xf32>
    %252 = arith.mulf %246, %250 : vector<2x32xf32>
    %253 = arith.addf %251, %252 : vector<2x32xf32>
    %254 = math.tanh %253 : vector<2x32xf32>
    %255 = arith.mulf %248, %254 : vector<2x32xf32>
    %cst_43 = arith.constant dense<0.000000e+00> : vector<2x128xf32>
    %256 = tpu.matmul %255, %2, %cst_43 {dimension_numbers = #tpu.dot_dimension_numbers<[1], [0], [0], [1], [0, 0, 1, 1], [], []>} : vector<2x32xf32>, vector<32x128xf32>, vector<2x128xf32> -> vector<2x128xf32>
    %257 = arith.addf %134, %256 : vector<2x128xf32>
    %258 = arith.negf %257 : vector<2x128xf32>
    %259 = math.exp %258 : vector<2x128xf32>
    %cst_44 = arith.constant 1.000000e+00 : f32
    %260 = vector.broadcast %cst_44 : f32 to vector<2x128xf32>
    %261 = arith.addf %260, %259 : vector<2x128xf32>
    %262 = arith.divf %260, %261 : vector<2x128xf32>
    %263 = vector.extract_strided_slice %262 {offsets = [0, 0], sizes = [2, 32], strides = [1, 1]} : vector<2x128xf32> to vector<2x32xf32>
    %264 = vector.extract_strided_slice %262 {offsets = [0, 32], sizes = [2, 32], strides = [1, 1]} : vector<2x128xf32> to vector<2x32xf32>
    %265 = vector.extract_strided_slice %262 {offsets = [0, 96], sizes = [2, 32], strides = [1, 1]} : vector<2x128xf32> to vector<2x32xf32>
    %266 = vector.extract_strided_slice %257 {offsets = [0, 64], sizes = [2, 32], strides = [1, 1]} : vector<2x128xf32> to vector<2x32xf32>
    %267 = math.tanh %266 : vector<2x32xf32>
    %268 = arith.mulf %264, %253 : vector<2x32xf32>
    %269 = arith.mulf %263, %267 : vector<2x32xf32>
    %270 = arith.addf %268, %269 : vector<2x32xf32>
    %271 = math.tanh %270 : vector<2x32xf32>
    %272 = arith.mulf %265, %271 : vector<2x32xf32>
    %273 = vector.broadcast %3 : vector<1x32xf32> to vector<2x32xf32>
    %274 = arith.mulf %272, %273 : vector<2x32xf32>
    %cst_45 = arith.constant dense<0.000000e+00> : vector<2xf32>
    %275 = vector.multi_reduction <add>, %274, %cst_45 [1] : vector<2x32xf32> to vector<2xf32>
    %276 = vector.shape_cast %275 : vector<2xf32> to vector<2x1xf32>
    %277 = vector.broadcast %4 : vector<1x1xf32> to vector<2x1xf32>
    %278 = arith.addf %276, %277 : vector<2x1xf32>
    %279 = arith.negf %278 : vector<2x1xf32>
    %280 = math.exp %279 : vector<2x1xf32>
    %cst_46 = arith.constant 1.000000e+00 : f32
    %281 = vector.broadcast %cst_46 : f32 to vector<2x1xf32>
    %282 = arith.addf %281, %280 : vector<2x1xf32>
    %283 = arith.divf %281, %282 : vector<2x1xf32>
    %c0_47 = arith.constant 0 : index
    %c0_48 = arith.constant 0 : index
    %284 = vector.load %arg2[%c0_47, %c0_48] : memref<2x1xf32, #tpu.memory_space<vmem>>, vector<2x1xf32>
    tpu.vector_store %arg2[%c0_47, %c0_48], %283 {strides = array<i32>} : memref<2x1xf32, #tpu.memory_space<vmem>>, vector<2x1xf32>,
    return
  }
}

</mosaic_0001>

<llo_original>
// kernel: forward.1
$region0: #{forward.1}
  #allocation0 [shape = 'u32[]', space=smem, size = 0x4, offset = 0x4, fixed_abs, tag = 'smem constant byte address 0x4 - core index']
  #allocation1 [shape = 'u32[144,128]{1,0:T(1,128)}', space=vmem, size = 0x12000, scoped, tag = 'internal scratch']
  %s0 = inlined_call_operand.hbm [shape: s32[2,8], index: 0, kind: input, shape index: {}]
  %s1 = inlined_call_operand.hbm [shape: f32[48,128], index: 1, kind: input, shape index: {}]
  %s2 = inlined_call_operand.vmem [shape: f32[2,1], index: 2, kind: output, shape index: {}]
  %s3 = sld [smem:[#allocation0]]
  $region26: #{forward.1} parent=0
    _
  %s5 = ssub.s32 1, %s3
  %s6 = scalar_select 0, %s5, %s3
  $region1: #{forward.1} parent=0
    #allocation2 [shape = 'u8[1024]{0}', space=vmem, size = 0x400, scoped, tag = 'input window, operand 0, single buffered']
    #allocation3 [shape = 's32[1]{0}', space=sflag, size = 0x4, scoped, tag = 'scoped memory for forward.1']
    #allocation4 [shape = 'u8[24576]{0}', space=vmem, size = 0x6000, scoped, tag = 'input window, operand 1, single buffered']
    #allocation5 [shape = 's32[1]{0}', space=sflag, size = 0x4, scoped, tag = 'scoped memory for forward.1']
    %7 = vsyncpa [#allocation3], 0
    %8 = vsyncpa [#allocation5], 0
    // Predicated region
    $region2: #{forward.1} parent=1 // pred_check
      _
    $region3: #{forward.1} parent=1 // pred_check_branch
      %10 = sbr.rel (0) target = $region5
    $region4: #{forward.1} parent=1 // pred_region
      %s12 = ssub.s32 32, 32
      %13 = vsyncadd [#allocation3], %s12
      %s15 = sshll.u32 [#allocation2], 4
      %s16 = int_to_ptr.vmem [resolvable:$true] %s15
      %18 = dma.hbm_to_vmem [thread:$0]  %s0, 32, %s16, [#allocation3]
    $region5: #{forward.1} parent=1 // pred_fallthru
      _
    // Predicated region
    $region6: #{forward.1} parent=1 // pred_check
      _
    $region7: #{forward.1} parent=1 // pred_check_branch
      %20 = sbr.rel (0) target = $region9
    $region8: #{forward.1} parent=1 // pred_region
      %s22 = ssub.s32 768, 768
      %23 = vsyncadd [#allocation5], %s22
      %s24 = sshll.u32 [#allocation4], 4
      %s25 = int_to_ptr.vmem [resolvable:$true] %s24
      %30 = dma.hbm_to_vmem [thread:$0]  %s1, 768, %s25, [#allocation5], 128, 128, 8
    $region9: #{forward.1} parent=1 // pred_fallthru
      _
    // Predicated region
    $region10: #{forward.1} parent=1 // pred_check
      _
    $region11: #{forward.1} parent=1 // pred_check_branch
      %32 = sbr.rel (0) target = $region13
    $region12: #{forward.1} parent=1 // pred_region
      %33 = dma.done [#allocation3], 32
    $region13: #{forward.1} parent=1 // pred_fallthru
      _
    // Predicated region
    $region14: #{forward.1} parent=1 // pred_check
      _
    $region15: #{forward.1} parent=1 // pred_check_branch
      %35 = sbr.rel (0) target = $region17
    $region16: #{forward.1} parent=1 // pred_region
      %36 = dma.done [#allocation5], 768
    $region17: #{forward.1} parent=1 // pred_fallthru
      _
    %v37 = vld [vmem:[#allocation2] sm:$0x3]
    %v38 = vld [vmem:[#allocation4] sm:$0x3]
    %v39 = vld [vmem:[#allocation4 + $0x8] sm:$0xff]
    %v40 = vld [vmem:[#allocation4 + $0x10] sm:$0xff]
    %v41 = vld [vmem:[#allocation4 + $0x18] sm:$0xff]
    %v42 = vld [vmem:[#allocation4 + $0x20] sm:$0xff]
    %v43 = vld [vmem:[#allocation4 + $0x28] sm:$0x1]
    %v44 = vld [vmem:[#allocation4 + $0x29] sm:$0x1]
    %vm45 = vcmp.eq.s32.totalorder %v37, 0
    %v46 = vsel %vm45, 1, 0
    %47 = vset.pattern.permute.xlu0 0
    %48 = vperm.xlu0 %47, %v46
    %v49 = vpop.permute.xlu0 %48
    %vm50 = vcmp.eq.s32.totalorder %v49, 1
    %v51 = vlaneseq
    %v52 = vshrl.u32 %v51, 7
    %v53 = vsub.s32 0, %v52
    %v54 = vrot.slane %v38, %v53
    %v55 = vsel %vm50, %v54, 0.0
    %vm56 = vcmp.eq.s32.totalorder %v37, 1
    %v57 = vsel %vm56, 1, 0
    %58 = vset.pattern.permute.xlu0 0
    %59 = vperm.xlu0 %58, %v57
    %v60 = vpop.permute.xlu0 %59
    %vm61 = vcmp.eq.s32.totalorder %v60, 1
    %v62 = vlaneseq
    %v63 = vshrl.u32 %v62, 7
    %v64 = vsub.s32 1, %v63
    %v65 = vrot.slane %v38, %v64
    %v66 = vsel %vm61, %v65, %v55
    %67 = vset.pattern.permute.xlu0 1
    %68 = vperm.xlu0 %67, %v46
    %v69 = vpop.permute.xlu0 %68
    %vm70 = vcmp.eq.s32.totalorder %v69, 1
    %v71 = vsel %vm70, %v54, 0.0
    %72 = vset.pattern.permute.xlu0 1
    %73 = vperm.xlu0 %72, %v57
    %v74 = vpop.permute.xlu0 %73
    %vm75 = vcmp.eq.s32.totalorder %v74, 1
    %v76 = vsel %vm75, %v65, %v71
    %77 = vset.pattern.permute.xlu0 2
    %78 = vperm.xlu0 %77, %v46
    %v79 = vpop.permute.xlu0 %78
    %vm80 = vcmp.eq.s32.totalorder %v79, 1
    %v81 = vsel %vm80, %v54, 0.0
    %82 = vset.pattern.permute.xlu0 2
    %83 = vperm.xlu0 %82, %v57
    %v84 = vpop.permute.xlu0 %83
    %vm85 = vcmp.eq.s32.totalorder %v84, 1
    %v86 = vsel %vm85, %v65, %v81
    %87 = vset.pattern.permute.xlu0 3
    %88 = vperm.xlu0 %87, %v46
    %v89 = vpop.permute.xlu0 %88
    %vm90 = vcmp.eq.s32.totalorder %v89, 1
    %v91 = vsel %vm90, %v54, 0.0
    %92 = vset.pattern.permute.xlu0 3
    %93 = vperm.xlu0 %92, %v57
    %v94 = vpop.permute.xlu0 %93
    %vm95 = vcmp.eq.s32.totalorder %v94, 1
    %v96 = vsel %vm95, %v65, %v91
    %97 = vset.pattern.permute.xlu0 4
    %98 = vperm.xlu0 %97, %v46
    %v99 = vpop.permute.xlu0 %98
    %vm100 = vcmp.eq.s32.totalorder %v99, 1
    %v101 = vsel %vm100, %v54, 0.0
    %102 = vset.pattern.permute.xlu0 4
    %103 = vperm.xlu0 %102, %v57
    %v104 = vpop.permute.xlu0 %103
    %vm105 = vcmp.eq.s32.totalorder %v104, 1
    %v106 = vsel %vm105, %v65, %v101
    %107 = vset.pattern.permute.xlu0 5
    %108 = vperm.xlu0 %107, %v46
    %v109 = vpop.permute.xlu0 %108
    %vm110 = vcmp.eq.s32.totalorder %v109, 1
    %v111 = vsel %vm110, %v54, 0.0
    %112 = vset.pattern.permute.xlu0 5
    %113 = vperm.xlu0 %112, %v57
    %v114 = vpop.permute.xlu0 %113
    %vm115 = vcmp.eq.s32.totalorder %v114, 1
    %v116 = vsel %vm115, %v65, %v111
    %117 = vset.pattern.permute.xlu0 6
    %118 = vperm.xlu0 %117, %v46
    %v119 = vpop.permute.xlu0 %118
    %vm120 = vcmp.eq.s32.totalorder %v119, 1
    %v121 = vsel %vm120, %v54, 0.0
    %122 = vset.pattern.permute.xlu0 6
    %123 = vperm.xlu0 %122, %v57
    %v124 = vpop.permute.xlu0 %123
    %vm125 = vcmp.eq.s32.totalorder %v124, 1
    %v126 = vsel %vm125, %v65, %v121
    %127 = vset.pattern.permute.xlu0 7
    %128 = vperm.xlu0 %127, %v46
    %v129 = vpop.permute.xlu0 %128
    %vm130 = vcmp.eq.s32.totalorder %v129, 1
    %v131 = vsel %vm130, %v54, 0.0
    %132 = vset.pattern.permute.xlu0 7
    %133 = vperm.xlu0 %132, %v57
    %v134 = vpop.permute.xlu0 %133
    %vm135 = vcmp.eq.s32.totalorder %v134, 1
    %v136 = vsel %vm135, %v65, %v131
    %vm137 = vcmask 261120
    %v139 = vsel %vm137, 0.0, 0
    %141 = vmatprep.subr.mxu0 0.0
    %142 = vmatpush1.msra.mxu0 %v39
    %143 = vmatprep.subr.mxu0 0.0
    %144 = vmatpush1.msra.mxu0 %v40
    %145 = vmatprep.subr.mxu0 0.0
    %146 = vmatpush1.msra.mxu0 %v41
    %147 = vmatprep.subr.mxu0 0.0
    %148 = vmatpush1.msra.mxu0 %v42
    %149 = vmatprep.subr.mxu0 0.0
    %150 = vmatpush1.msra.mxu0 0.0
    %151 = vmatprep.subr.mxu0 0.0
    %152 = vmatpush1.msra.mxu0 0.0
    %153 = vmatprep.subr.mxu0 0.0
    %154 = vmatpush1.msra.mxu0 0.0
    %155 = vmatprep.subr.mxu0 0.0
    %156 = vmatpush1.msra.mxu0 0.0
    %157 = vmatprep.subr.mxu0 0.0
    %158 = vmatpush1.msra.mxu0 0.0
    %159 = vmatprep.subr.mxu0 0.0
    %160 = vmatpush1.msra.mxu0 0.0
    %161 = vmatprep.subr.mxu0 0.0
    %162 = vmatpush1.msra.mxu0 0.0
    %163 = vmatprep.subr.mxu0 0.0
    %164 = vmatpush1.msra.mxu0 0.0
    %165 = vmatprep.subr.mxu0 0.0
    %166 = vmatpush1.msra.mxu0 0.0
    %167 = vmatprep.subr.mxu0 0.0
    %168 = vmatpush1.msra.mxu0 0.0
    %169 = vmatprep.subr.mxu0 0.0
    %170 = vmatpush1.msra.mxu0 0.0
    %171 = vmatprep.subr.mxu0 0.0
    %172 = vmatpush1.msra.mxu0 0.0
    %173 = vmatprep.subr.mxu0 0.0
    %174 = vmatpush1.msra.mxu0 0.0
    %175 = vmatprep.subr.mxu0 0.0
    %176 = vmatpush1.msra.mxu0 0.0
    %177 = vmatprep.subr.mxu0 0.0
    %178 = vmatpush1.msra.mxu0 0.0
    %179 = vmatprep.subr.mxu0 0.0
    %180 = vmatpush1.msra.mxu0 0.0
    %181 = vmatprep.subr.mxu0 0.0
    %182 = vmatpush1.msra.mxu0 0.0
    %183 = vmatprep.subr.mxu0 0.0
    %184 = vmatpush1.msra.mxu0 0.0
    %185 = vmatprep.subr.mxu0 0.0
    %186 = vmatpush1.msra.mxu0 0.0
    %187 = vmatprep.subr.mxu0 0.0
    %188 = vmatpush1.msra.mxu0 0.0
    %189 = vmatprep.subr.mxu0 0.0
    %190 = vmatpush1.msra.mxu0 0.0
    %191 = vmatprep.subr.mxu0 0.0
    %192 = vmatpush1.msra.mxu0 0.0
    %193 = vmatprep.subr.mxu0 0.0
    %194 = vmatpush1.msra.mxu0 0.0
    %195 = vmatprep.subr.mxu0 0.0
    %196 = vmatpush1.msra.mxu0 0.0
    %197 = vmatprep.subr.mxu0 0.0
    %198 = vmatpush1.msra.mxu0 0.0
    %199 = vmatprep.subr.mxu0 0.0
    %200 = vmatpush1.msra.mxu0 0.0
    %201 = vmatprep.subr.mxu0 0.0
    %202 = vmatpush1.msra.mxu0 0.0
    %203 = vmatprep.subr.mxu0 0.0
    %204 = vmatpush1.msra.mxu0 0.0
    %205 = vmatprep.mubr.f32.mxu0 0.0
    %206 = vmatmul.mubr.f32.gmra.mrb[0].mxu0 %v139
    %v207 = vpop.f32.mrb[0].mxu0
    %v208 = vadd.f32 0.0, %v207
    %v209 = vpop.f32.mrb[0].mxu0
    %210 = vdwg.mxu0
    %v211 = vadd.f32 %v66, %v208
    %v212 = vxor.u32 %v211, 2147483648
    %v213 = vmul.f32 %v212, 1.442695
    %v214 = vpow.pop %v213
    %v215 = vadd.f32 %v214, 1.0
    %v216 = vrcp.pop %v215
    %v217 = vmul.f32 1.0, %v216
    %v218 = vtanh.pop %v211
    %v219 = vmul.f32 %v217, 0.0
    %221 = vrot.lane.b32.xlu0 %v218, 64
    %v222 = vpop.permute.xlu0 %221
    %v224 = vmul.f32 %v217, %v222
    %226 = vrot.lane.b32.xlu0 %v224, 32
    %v227 = vpop.permute.xlu0 %226
    %v229 = vadd.f32 %v219, %v227
    %v230 = vtanh.pop %v229
    %232 = vrot.lane.b32.xlu0 %v230, 64
    %v233 = vpop.permute.xlu0 %232
    %v235 = vmul.f32 %v217, %v233
    %237 = vrot.lane.b32.xlu0 %v235, 32
    %v238 = vpop.permute.xlu0 %237
    %v239 = vsel %vm137, %v238, 0
    %241 = vmatprep.subr.mxu0 0.0
    %242 = vmatpush1.msra.mxu0 %v39
    %243 = vmatprep.subr.mxu0 0.0
    %244 = vmatpush1.msra.mxu0 %v40
    %245 = vmatprep.subr.mxu0 0.0
    %246 = vmatpush1.msra.mxu0 %v41
    %247 = vmatprep.subr.mxu0 0.0
    %248 = vmatpush1.msra.mxu0 %v42
    %249 = vmatprep.subr.mxu0 0.0
    %250 = vmatpush1.msra.mxu0 0.0
    %251 = vmatprep.subr.mxu0 0.0
    %252 = vmatpush1.msra.mxu0 0.0
    %253 = vmatprep.subr.mxu0 0.0
    %254 = vmatpush1.msra.mxu0 0.0
    %255 = vmatprep.subr.mxu0 0.0
    %256 = vmatpush1.msra.mxu0 0.0
    %257 = vmatprep.subr.mxu0 0.0
    %258 = vmatpush1.msra.mxu0 0.0
    %259 = vmatprep.subr.mxu0 0.0
    %260 = vmatpush1.msra.mxu0 0.0
    %261 = vmatprep.subr.mxu0 0.0
    %262 = vmatpush1.msra.mxu0 0.0
    %263 = vmatprep.subr.mxu0 0.0
    %264 = vmatpush1.msra.mxu0 0.0
    %265 = vmatprep.subr.mxu0 0.0
    %266 = vmatpush1.msra.mxu0 0.0
    %267 = vmatprep.subr.mxu0 0.0
    %268 = vmatpush1.msra.mxu0 0.0
    %269 = vmatprep.subr.mxu0 0.0
    %270 = vmatpush1.msra.mxu0 0.0
    %271 = vmatprep.subr.mxu0 0.0
    %272 = vmatpush1.msra.mxu0 0.0
    %273 = vmatprep.subr.mxu0 0.0
    %274 = vmatpush1.msra.mxu0 0.0
    %275 = vmatprep.subr.mxu0 0.0
    %276 = vmatpush1.msra.mxu0 0.0
    %277 = vmatprep.subr.mxu0 0.0
    %278 = vmatpush1.msra.mxu0 0.0
    %279 = vmatprep.subr.mxu0 0.0
    %280 = vmatpush1.msra.mxu0 0.0
    %281 = vmatprep.subr.mxu0 0.0
    %282 = vmatpush1.msra.mxu0 0.0
    %283 = vmatprep.subr.mxu0 0.0
    %284 = vmatpush1.msra.mxu0 0.0
    %285 = vmatprep.subr.mxu0 0.0
    %286 = vmatpush1.msra.mxu0 0.0
    %287 = vmatprep.subr.mxu0 0.0
    %288 = vmatpush1.msra.mxu0 0.0
    %289 = vmatprep.subr.mxu0 0.0
    %290 = vmatpush1.msra.mxu0 0.0
    %291 = vmatprep.subr.mxu0 0.0
    %292 = vmatpush1.msra.mxu0 0.0
    %293 = vmatprep.subr.mxu0 0.0
    %294 = vmatpush1.msra.mxu0 0.0
    %295 = vmatprep.subr.mxu0 0.0
    %296 = vmatpush1.msra.mxu0 0.0
    %297 = vmatprep.subr.mxu0 0.0
    %298 = vmatpush1.msra.mxu0 0.0
    %299 = vmatprep.subr.mxu0 0.0
    %300 = vmatpush1.msra.mxu0 0.0
    %301 = vmatprep.subr.mxu0 0.0
    %302 = vmatpush1.msra.mxu0 0.0
    %303 = vmatprep.subr.mxu0 0.0
    %304 = vmatpush1.msra.mxu0 0.0
    %305 = vmatprep.mubr.f32.mxu0 0.0
    %306 = vmatmul.mubr.f32.gmra.mrb[0].mxu0 %v239
    %v307 = vpop.f32.mrb[0].mxu0
    %v308 = vadd.f32 0.0, %v307
    %v309 = vpop.f32.mrb[0].mxu0
    %310 = vdwg.mxu0
    %v311 = vadd.f32 %v76, %v308
    %v312 = vxor.u32 %v311, 2147483648
    %v313 = vmul.f32 %v312, 1.442695
    %v314 = vpow.pop %v313
    %v315 = vadd.f32 %v314, 1.0
    %v316 = vrcp.pop %v315
    %v317 = vmul.f32 1.0, %v316
    %v318 = vtanh.pop %v311
    %v319 = vmul.f32 %v317, %v229
    %321 = vrot.lane.b32.xlu0 %v318, 64
    %v322 = vpop.permute.xlu0 %321
    %v324 = vmul.f32 %v317, %v322
    %326 = vrot.lane.b32.xlu0 %v324, 32
    %v327 = vpop.permute.xlu0 %326
    %v329 = vadd.f32 %v319, %v327
    %v330 = vtanh.pop %v329
    %332 = vrot.lane.b32.xlu0 %v330, 64
    %v333 = vpop.permute.xlu0 %332
    %v335 = vmul.f32 %v317, %v333
    %337 = vrot.lane.b32.xlu0 %v335, 32
    %v338 = vpop.permute.xlu0 %337
    %v339 = vsel %vm137, %v338, 0
    %341 = vmatprep.subr.mxu0 0.0
    %342 = vmatpush1.msra.mxu0 %v39
    %343 = vmatprep.subr.mxu0 0.0
    %344 = vmatpush1.msra.mxu0 %v40
    %345 = vmatprep.subr.mxu0 0.0
    %346 = vmatpush1.msra.mxu0 %v41
    %347 = vmatprep.subr.mxu0 0.0
    %348 = vmatpush1.msra.mxu0 %v42
    %349 = vmatprep.subr.mxu0 0.0
    %350 = vmatpush1.msra.mxu0 0.0
    %351 = vmatprep.subr.mxu0 0.0
    %352 = vmatpush1.msra.mxu0 0.0
    %353 = vmatprep.subr.mxu0 0.0
    %354 = vmatpush1.msra.mxu0 0.0
    %355 = vmatprep.subr.mxu0 0.0
    %356 = vmatpush1.msra.mxu0 0.0
    %357 = vmatprep.subr.mxu0 0.0
    %358 = vmatpush1.msra.mxu0 0.0
    %359 = vmatprep.subr.mxu0 0.0
    %360 = vmatpush1.msra.mxu0 0.0
    %361 = vmatprep.subr.mxu0 0.0
    %362 = vmatpush1.msra.mxu0 0.0
    %363 = vmatprep.subr.mxu0 0.0
    %364 = vmatpush1.msra.mxu0 0.0
    %365 = vmatprep.subr.mxu0 0.0
    %366 = vmatpush1.msra.mxu0 0.0
    %367 = vmatprep.subr.mxu0 0.0
    %368 = vmatpush1.msra.mxu0 0.0
    %369 = vmatprep.subr.mxu0 0.0
    %370 = vmatpush1.msra.mxu0 0.0
    %371 = vmatprep.subr.mxu0 0.0
    %372 = vmatpush1.msra.mxu0 0.0
    %373 = vmatprep.subr.mxu0 0.0
    %374 = vmatpush1.msra.mxu0 0.0
    %375 = vmatprep.subr.mxu0 0.0
    %376 = vmatpush1.msra.mxu0 0.0
    %377 = vmatprep.subr.mxu0 0.0
    %378 = vmatpush1.msra.mxu0 0.0
    %379 = vmatprep.subr.mxu0 0.0
    %380 = vmatpush1.msra.mxu0 0.0
    %381 = vmatprep.subr.mxu0 0.0
    %382 = vmatpush1.msra.mxu0 0.0
    %383 = vmatprep.subr.mxu0 0.0
    %384 = vmatpush1.msra.mxu0 0.0
    %385 = vmatprep.subr.mxu0 0.0
    %386 = vmatpush1.msra.mxu0 0.0
    %387 = vmatprep.subr.mxu0 0.0
    %388 = vmatpush1.msra.mxu0 0.0
    %389 = vmatprep.subr.mxu0 0.0
    %390 = vmatpush1.msra.mxu0 0.0
    %391 = vmatprep.subr.mxu0 0.0
    %392 = vmatpush1.msra.mxu0 0.0
    %393 = vmatprep.subr.mxu0 0.0
    %394 = vmatpush1.msra.mxu0 0.0
    %395 = vmatprep.subr.mxu0 0.0
    %396 = vmatpush1.msra.mxu0 0.0
    %397 = vmatprep.subr.mxu0 0.0
    %398 = vmatpush1.msra.mxu0 0.0
    %399 = vmatprep.subr.mxu0 0.0
    %400 = vmatpush1.msra.mxu0 0.0
    %401 = vmatprep.subr.mxu0 0.0
    %402 = vmatpush1.msra.mxu0 0.0
    %403 = vmatprep.subr.mxu0 0.0
    %404 = vmatpush1.msra.mxu0 0.0
    %405 = vmatprep.mubr.f32.mxu0 0.0
    %406 = vmatmul.mubr.f32.gmra.mrb[0].mxu0 %v339
    %v407 = vpop.f32.mrb[0].mxu0
    %v408 = vadd.f32 0.0, %v407
    %v409 = vpop.f32.mrb[0].mxu0
    %410 = vdwg.mxu0
    %v411 = vadd.f32 %v86, %v408
    %v412 = vxor.u32 %v411, 2147483648
    %v413 = vmul.f32 %v412, 1.442695
    %v414 = vpow.pop %v413
    %v415 = vadd.f32 %v414, 1.0
    %v416 = vrcp.pop %v415
    %v417 = vmul.f32 1.0, %v416
    %v418 = vtanh.pop %v411
    %v419 = vmul.f32 %v417, %v329
    %421 = vrot.lane.b32.xlu0 %v418, 64
    %v422 = vpop.permute.xlu0 %421
    %v424 = vmul.f32 %v417, %v422
    %426 = vrot.lane.b32.xlu0 %v424, 32
    %v427 = vpop.permute.xlu0 %426
    %v429 = vadd.f32 %v419, %v427
    %v430 = vtanh.pop %v429
    %432 = vrot.lane.b32.xlu0 %v430, 64
    %v433 = vpop.permute.xlu0 %432
    %v435 = vmul.f32 %v417, %v433
    %437 = vrot.lane.b32.xlu0 %v435, 32
    %v438 = vpop.permute.xlu0 %437
    %v439 = vsel %vm137, %v438, 0
    %441 = vmatprep.subr.mxu0 0.0
    %442 = vmatpush1.msra.mxu0 %v39
    %443 = vmatprep.subr.mxu0 0.0
    %444 = vmatpush1.msra.mxu0 %v40
    %445 = vmatprep.subr.mxu0 0.0
    %446 = vmatpush1.msra.mxu0 %v41
    %447 = vmatprep.subr.mxu0 0.0
    %448 = vmatpush1.msra.mxu0 %v42
    %449 = vmatprep.subr.mxu0 0.0
    %450 = vmatpush1.msra.mxu0 0.0
    %451 = vmatprep.subr.mxu0 0.0
    %452 = vmatpush1.msra.mxu0 0.0
    %453 = vmatprep.subr.mxu0 0.0
    %454 = vmatpush1.msra.mxu0 0.0
    %455 = vmatprep.subr.mxu0 0.0
    %456 = vmatpush1.msra.mxu0 0.0
    %457 = vmatprep.subr.mxu0 0.0
    %458 = vmatpush1.msra.mxu0 0.0
    %459 = vmatprep.subr.mxu0 0.0
    %460 = vmatpush1.msra.mxu0 0.0
    %461 = vmatprep.subr.mxu0 0.0
    %462 = vmatpush1.msra.mxu0 0.0
    %463 = vmatprep.subr.mxu0 0.0
    %464 = vmatpush1.msra.mxu0 0.0
    %465 = vmatprep.subr.mxu0 0.0
    %466 = vmatpush1.msra.mxu0 0.0
    %467 = vmatprep.subr.mxu0 0.0
    %468 = vmatpush1.msra.mxu0 0.0
    %469 = vmatprep.subr.mxu0 0.0
    %470 = vmatpush1.msra.mxu0 0.0
    %471 = vmatprep.subr.mxu0 0.0
    %472 = vmatpush1.msra.mxu0 0.0
    %473 = vmatprep.subr.mxu0 0.0
    %474 = vmatpush1.msra.mxu0 0.0
    %475 = vmatprep.subr.mxu0 0.0
    %476 = vmatpush1.msra.mxu0 0.0
    %477 = vmatprep.subr.mxu0 0.0
    %478 = vmatpush1.msra.mxu0 0.0
    %479 = vmatprep.subr.mxu0 0.0
    %480 = vmatpush1.msra.mxu0 0.0
    %481 = vmatprep.subr.mxu0 0.0
    %482 = vmatpush1.msra.mxu0 0.0
    %483 = vmatprep.subr.mxu0 0.0
    %484 = vmatpush1.msra.mxu0 0.0
    %485 = vmatprep.subr.mxu0 0.0
    %486 = vmatpush1.msra.mxu0 0.0
    %487 = vmatprep.subr.mxu0 0.0
    %488 = vmatpush1.msra.mxu0 0.0
    %489 = vmatprep.subr.mxu0 0.0
    %490 = vmatpush1.msra.mxu0 0.0
    %491 = vmatprep.subr.mxu0 0.0
    %492 = vmatpush1.msra.mxu0 0.0
    %493 = vmatprep.subr.mxu0 0.0
    %494 = vmatpush1.msra.mxu0 0.0
    %495 = vmatprep.subr.mxu0 0.0
    %496 = vmatpush1.msra.mxu0 0.0
    %497 = vmatprep.subr.mxu0 0.0
    %498 = vmatpush1.msra.mxu0 0.0
    %499 = vmatprep.subr.mxu0 0.0
    %500 = vmatpush1.msra.mxu0 0.0
    %501 = vmatprep.subr.mxu0 0.0
    %502 = vmatpush1.msra.mxu0 0.0
    %503 = vmatprep.subr.mxu0 0.0
    %504 = vmatpush1.msra.mxu0 0.0
    %505 = vmatprep.mubr.f32.mxu0 0.0
    %506 = vmatmul.mubr.f32.gmra.mrb[0].mxu0 %v439
    %v507 = vpop.f32.mrb[0].mxu0
    %v508 = vadd.f32 0.0, %v507
    %v509 = vpop.f32.mrb[0].mxu0
    %510 = vdwg.mxu0
    %v511 = vadd.f32 %v96, %v508
    %v512 = vxor.u32 %v511, 2147483648
    %v513 = vmul.f32 %v512, 1.442695
    %v514 = vpow.pop %v513
    %v515 = vadd.f32 %v514, 1.0
    %v516 = vrcp.pop %v515
    %v517 = vmul.f32 1.0, %v516
    %v518 = vtanh.pop %v511
    %v519 = vmul.f32 %v517, %v429
    %521 = vrot.lane.b32.xlu0 %v518, 64
    %v522 = vpop.permute.xlu0 %521
    %v524 = vmul.f32 %v517, %v522
    %526 = vrot.lane.b32.xlu0 %v524, 32
    %v527 = vpop.permute.xlu0 %526
    %v529 = vadd.f32 %v519, %v527
    %v530 = vtanh.pop %v529
    %532 = vrot.lane.b32.xlu0 %v530, 64
    %v533 = vpop.permute.xlu0 %532
    %v535 = vmul.f32 %v517, %v533
    %537 = vrot.lane.b32.xlu0 %v535, 32
    %v538 = vpop.permute.xlu0 %537
    %v539 = vsel %vm137, %v538, 0
    %541 = vmatprep.subr.mxu0 0.0
    %542 = vmatpush1.msra.mxu0 %v39
    %543 = vmatprep.subr.mxu0 0.0
    %544 = vmatpush1.msra.mxu0 %v40
    %545 = vmatprep.subr.mxu0 0.0
    %546 = vmatpush1.msra.mxu0 %v41
    %547 = vmatprep.subr.mxu0 0.0
    %548 = vmatpush1.msra.mxu0 %v42
    %549 = vmatprep.subr.mxu0 0.0
    %550 = vmatpush1.msra.mxu0 0.0
    %551 = vmatprep.subr.mxu0 0.0
    %552 = vmatpush1.msra.mxu0 0.0
    %553 = vmatprep.subr.mxu0 0.0
    %554 = vmatpush1.msra.mxu0 0.0
    %555 = vmatprep.subr.mxu0 0.0
    %556 = vmatpush1.msra.mxu0 0.0
    %557 = vmatprep.subr.mxu0 0.0
    %558 = vmatpush1.msra.mxu0 0.0
    %559 = vmatprep.subr.mxu0 0.0
    %560 = vmatpush1.msra.mxu0 0.0
    %561 = vmatprep.subr.mxu0 0.0
    %562 = vmatpush1.msra.mxu0 0.0
    %563 = vmatprep.subr.mxu0 0.0
    %564 = vmatpush1.msra.mxu0 0.0
    %565 = vmatprep.subr.mxu0 0.0
    %566 = vmatpush1.msra.mxu0 0.0
    %567 = vmatprep.subr.mxu0 0.0
    %568 = vmatpush1.msra.mxu0 0.0
    %569 = vmatprep.subr.mxu0 0.0
    %570 = vmatpush1.msra.mxu0 0.0
    %571 = vmatprep.subr.mxu0 0.0
    %572 = vmatpush1.msra.mxu0 0.0
    %573 = vmatprep.subr.mxu0 0.0
    %574 = vmatpush1.msra.mxu0 0.0
    %575 = vmatprep.subr.mxu0 0.0
    %576 = vmatpush1.msra.mxu0 0.0
    %577 = vmatprep.subr.mxu0 0.0
    %578 = vmatpush1.msra.mxu0 0.0
    %579 = vmatprep.subr.mxu0 0.0
    %580 = vmatpush1.msra.mxu0 0.0
    %581 = vmatprep.subr.mxu0 0.0
    %582 = vmatpush1.msra.mxu0 0.0
    %583 = vmatprep.subr.mxu0 0.0
    %584 = vmatpush1.msra.mxu0 0.0
    %585 = vmatprep.subr.mxu0 0.0
    %586 = vmatpush1.msra.mxu0 0.0
    %587 = vmatprep.subr.mxu0 0.0
    %588 = vmatpush1.msra.mxu0 0.0
    %589 = vmatprep.subr.mxu0 0.0
    %590 = vmatpush1.msra.mxu0 0.0
    %591 = vmatprep.subr.mxu0 0.0
    %592 = vmatpush1.msra.mxu0 0.0
    %593 = vmatprep.subr.mxu0 0.0
    %594 = vmatpush1.msra.mxu0 0.0
    %595 = vmatprep.subr.mxu0 0.0
    %596 = vmatpush1.msra.mxu0 0.0
    %597 = vmatprep.subr.mxu0 0.0
    %598 = vmatpush1.msra.mxu0 0.0
    %599 = vmatprep.subr.mxu0 0.0
    %600 = vmatpush1.msra.mxu0 0.0
    %601 = vmatprep.subr.mxu0 0.0
    %602 = vmatpush1.msra.mxu0 0.0
    %603 = vmatprep.subr.mxu0 0.0
    %604 = vmatpush1.msra.mxu0 0.0
    %605 = vmatprep.mubr.f32.mxu0 0.0
    %606 = vmatmul.mubr.f32.gmra.mrb[0].mxu0 %v539
    %v607 = vpop.f32.mrb[0].mxu0
    %v608 = vadd.f32 0.0, %v607
    %v609 = vpop.f32.mrb[0].mxu0
    %610 = vdwg.mxu0
    %v611 = vadd.f32 %v106, %v608
    %v612 = vxor.u32 %v611, 2147483648
    %v613 = vmul.f32 %v612, 1.442695
    %v614 = vpow.pop %v613
    %v615 = vadd.f32 %v614, 1.0
    %v616 = vrcp.pop %v615
    %v617 = vmul.f32 1.0, %v616
    %v618 = vtanh.pop %v611
    %v619 = vmul.f32 %v617, %v529
    %621 = vrot.lane.b32.xlu0 %v618, 64
    %v622 = vpop.permute.xlu0 %621
    %v624 = vmul.f32 %v617, %v622
    %626 = vrot.lane.b32.xlu0 %v624, 32
    %v627 = vpop.permute.xlu0 %626
    %v629 = vadd.f32 %v619, %v627
    %v630 = vtanh.pop %v629
    %632 = vrot.lane.b32.xlu0 %v630, 64
    %v633 = vpop.permute.xlu0 %632
    %v635 = vmul.f32 %v617, %v633
    %637 = vrot.lane.b32.xlu0 %v635, 32
    %v638 = vpop.permute.xlu0 %637
    %v639 = vsel %vm137, %v638, 0
    %641 = vmatprep.subr.mxu0 0.0
    %642 = vmatpush1.msra.mxu0 %v39
    %643 = vmatprep.subr.mxu0 0.0
    %644 = vmatpush1.msra.mxu0 %v40
    %645 = vmatprep.subr.mxu0 0.0
    %646 = vmatpush1.msra.mxu0 %v41
    %647 = vmatprep.subr.mxu0 0.0
    %648 = vmatpush1.msra.mxu0 %v42
    %649 = vmatprep.subr.mxu0 0.0
    %650 = vmatpush1.msra.mxu0 0.0
    %651 = vmatprep.subr.mxu0 0.0
    %652 = vmatpush1.msra.mxu0 0.0
    %653 = vmatprep.subr.mxu0 0.0
    %654 = vmatpush1.msra.mxu0 0.0
    %655 = vmatprep.subr.mxu0 0.0
    %656 = vmatpush1.msra.mxu0 0.0
    %657 = vmatprep.subr.mxu0 0.0
    %658 = vmatpush1.msra.mxu0 0.0
    %659 = vmatprep.subr.mxu0 0.0
    %660 = vmatpush1.msra.mxu0 0.0
    %661 = vmatprep.subr.mxu0 0.0
    %662 = vmatpush1.msra.mxu0 0.0
    %663 = vmatprep.subr.mxu0 0.0
    %664 = vmatpush1.msra.mxu0 0.0
    %665 = vmatprep.subr.mxu0 0.0
    %666 = vmatpush1.msra.mxu0 0.0
    %667 = vmatprep.subr.mxu0 0.0
    %668 = vmatpush1.msra.mxu0 0.0
    %669 = vmatprep.subr.mxu0 0.0
    %670 = vmatpush1.msra.mxu0 0.0
    %671 = vmatprep.subr.mxu0 0.0
    %672 = vmatpush1.msra.mxu0 0.0
    %673 = vmatprep.subr.mxu0 0.0
    %674 = vmatpush1.msra.mxu0 0.0
    %675 = vmatprep.subr.mxu0 0.0
    %676 = vmatpush1.msra.mxu0 0.0
    %677 = vmatprep.subr.mxu0 0.0
    %678 = vmatpush1.msra.mxu0 0.0
    %679 = vmatprep.subr.mxu0 0.0
    %680 = vmatpush1.msra.mxu0 0.0
    %681 = vmatprep.subr.mxu0 0.0
    %682 = vmatpush1.msra.mxu0 0.0
    %683 = vmatprep.subr.mxu0 0.0
    %684 = vmatpush1.msra.mxu0 0.0
    %685 = vmatprep.subr.mxu0 0.0
    %686 = vmatpush1.msra.mxu0 0.0
    %687 = vmatprep.subr.mxu0 0.0
    %688 = vmatpush1.msra.mxu0 0.0
    %689 = vmatprep.subr.mxu0 0.0
    %690 = vmatpush1.msra.mxu0 0.0
    %691 = vmatprep.subr.mxu0 0.0
    %692 = vmatpush1.msra.mxu0 0.0
    %693 = vmatprep.subr.mxu0 0.0
    %694 = vmatpush1.msra.mxu0 0.0
    %695 = vmatprep.subr.mxu0 0.0
    %696 = vmatpush1.msra.mxu0 0.0
    %697 = vmatprep.subr.mxu0 0.0
    %698 = vmatpush1.msra.mxu0 0.0
    %699 = vmatprep.subr.mxu0 0.0
    %700 = vmatpush1.msra.mxu0 0.0
    %701 = vmatprep.subr.mxu0 0.0
    %702 = vmatpush1.msra.mxu0 0.0
    %703 = vmatprep.subr.mxu0 0.0
    %704 = vmatpush1.msra.mxu0 0.0
    %705 = vmatprep.mubr.f32.mxu0 0.0
    %706 = vmatmul.mubr.f32.gmra.mrb[0].mxu0 %v639
    %v707 = vpop.f32.mrb[0].mxu0
    %v708 = vadd.f32 0.0, %v707
    %v709 = vpop.f32.mrb[0].mxu0
    %710 = vdwg.mxu0
    %v711 = vadd.f32 %v116, %v708
    %v712 = vxor.u32 %v711, 2147483648
    %v713 = vmul.f32 %v712, 1.442695
    %v714 = vpow.pop %v713
    %v715 = vadd.f32 %v714, 1.0
    %v716 = vrcp.pop %v715
    %v717 = vmul.f32 1.0, %v716
    %v718 = vtanh.pop %v711
    %v719 = vmul.f32 %v717, %v629
    %721 = vrot.lane.b32.xlu0 %v718, 64
    %v722 = vpop.permute.xlu0 %721
    %v724 = vmul.f32 %v717, %v722
    %726 = vrot.lane.b32.xlu0 %v724, 32
    %v727 = vpop.permute.xlu0 %726
    %v729 = vadd.f32 %v719, %v727
    %v730 = vtanh.pop %v729
    %732 = vrot.lane.b32.xlu0 %v730, 64
    %v733 = vpop.permute.xlu0 %732
    %v735 = vmul.f32 %v717, %v733
    %737 = vrot.lane.b32.xlu0 %v735, 32
    %v738 = vpop.permute.xlu0 %737
    %v739 = vsel %vm137, %v738, 0
    %741 = vmatprep.subr.mxu0 0.0
    %742 = vmatpush1.msra.mxu0 %v39
    %743 = vmatprep.subr.mxu0 0.0
    %744 = vmatpush1.msra.mxu0 %v40
    %745 = vmatprep.subr.mxu0 0.0
    %746 = vmatpush1.msra.mxu0 %v41
    %747 = vmatprep.subr.mxu0 0.0
    %748 = vmatpush1.msra.mxu0 %v42
    %749 = vmatprep.subr.mxu0 0.0
    %750 = vmatpush1.msra.mxu0 0.0
    %751 = vmatprep.subr.mxu0 0.0
    %752 = vmatpush1.msra.mxu0 0.0
    %753 = vmatprep.subr.mxu0 0.0
    %754 = vmatpush1.msra.mxu0 0.0
    %755 = vmatprep.subr.mxu0 0.0
    %756 = vmatpush1.msra.mxu0 0.0
    %757 = vmatprep.subr.mxu0 0.0
    %758 = vmatpush1.msra.mxu0 0.0
    %759 = vmatprep.subr.mxu0 0.0
    %760 = vmatpush1.msra.mxu0 0.0
    %761 = vmatprep.subr.mxu0 0.0
    %762 = vmatpush1.msra.mxu0 0.0
    %763 = vmatprep.subr.mxu0 0.0
    %764 = vmatpush1.msra.mxu0 0.0
    %765 = vmatprep.subr.mxu0 0.0
    %766 = vmatpush1.msra.mxu0 0.0
    %767 = vmatprep.subr.mxu0 0.0
    %768 = vmatpush1.msra.mxu0 0.0
    %769 = vmatprep.subr.mxu0 0.0
    %770 = vmatpush1.msra.mxu0 0.0
    %771 = vmatprep.subr.mxu0 0.0
    %772 = vmatpush1.msra.mxu0 0.0
    %773 = vmatprep.subr.mxu0 0.0
    %774 = vmatpush1.msra.mxu0 0.0
    %775 = vmatprep.subr.mxu0 0.0
    %776 = vmatpush1.msra.mxu0 0.0
    %777 = vmatprep.subr.mxu0 0.0
    %778 = vmatpush1.msra.mxu0 0.0
    %779 = vmatprep.subr.mxu0 0.0
    %780 = vmatpush1.msra.mxu0 0.0
    %781 = vmatprep.subr.mxu0 0.0
    %782 = vmatpush1.msra.mxu0 0.0
    %783 = vmatprep.subr.mxu0 0.0
    %784 = vmatpush1.msra.mxu0 0.0
    %785 = vmatprep.subr.mxu0 0.0
    %786 = vmatpush1.msra.mxu0 0.0
    %787 = vmatprep.subr.mxu0 0.0
    %788 = vmatpush1.msra.mxu0 0.0
    %789 = vmatprep.subr.mxu0 0.0
    %790 = vmatpush1.msra.mxu0 0.0
    %791 = vmatprep.subr.mxu0 0.0
    %792 = vmatpush1.msra.mxu0 0.0
    %793 = vmatprep.subr.mxu0 0.0
    %794 = vmatpush1.msra.mxu0 0.0
    %795 = vmatprep.subr.mxu0 0.0
    %796 = vmatpush1.msra.mxu0 0.0
    %797 = vmatprep.subr.mxu0 0.0
    %798 = vmatpush1.msra.mxu0 0.0
    %799 = vmatprep.subr.mxu0 0.0
    %800 = vmatpush1.msra.mxu0 0.0
    %801 = vmatprep.subr.mxu0 0.0
    %802 = vmatpush1.msra.mxu0 0.0
    %803 = vmatprep.subr.mxu0 0.0
    %804 = vmatpush1.msra.mxu0 0.0
    %805 = vmatprep.mubr.f32.mxu0 0.0
    %806 = vmatmul.mubr.f32.gmra.mrb[0].mxu0 %v739
    %v807 = vpop.f32.mrb[0].mxu0
    %v808 = vadd.f32 0.0, %v807
    %v809 = vpop.f32.mrb[0].mxu0
    %810 = vdwg.mxu0
    %v811 = vadd.f32 %v126, %v808
    %v812 = vxor.u32 %v811, 2147483648
    %v813 = vmul.f32 %v812, 1.442695
    %v814 = vpow.pop %v813
    %v815 = vadd.f32 %v814, 1.0
    %v816 = vrcp.pop %v815
    %v817 = vmul.f32 1.0, %v816
    %v818 = vtanh.pop %v811
    %v819 = vmul.f32 %v817, %v729
    %821 = vrot.lane.b32.xlu0 %v818, 64
    %v822 = vpop.permute.xlu0 %821
    %v824 = vmul.f32 %v817, %v822
    %826 = vrot.lane.b32.xlu0 %v824, 32
    %v827 = vpop.permute.xlu0 %826
    %v829 = vadd.f32 %v819, %v827
    %v830 = vtanh.pop %v829
    %832 = vrot.lane.b32.xlu0 %v830, 64
    %v833 = vpop.permute.xlu0 %832
    %v835 = vmul.f32 %v817, %v833
    %837 = vrot.lane.b32.xlu0 %v835, 32
    %v838 = vpop.permute.xlu0 %837
    %v839 = vsel %vm137, %v838, 0
    %841 = vmatprep.subr.mxu0 0.0
    %842 = vmatpush1.msra.mxu0 %v39
    %843 = vmatprep.subr.mxu0 0.0
    %844 = vmatpush1.msra.mxu0 %v40
    %845 = vmatprep.subr.mxu0 0.0
    %846 = vmatpush1.msra.mxu0 %v41
    %847 = vmatprep.subr.mxu0 0.0
    %848 = vmatpush1.msra.mxu0 %v42
    %849 = vmatprep.subr.mxu0 0.0
    %850 = vmatpush1.msra.mxu0 0.0
    %851 = vmatprep.subr.mxu0 0.0
    %852 = vmatpush1.msra.mxu0 0.0
    %853 = vmatprep.subr.mxu0 0.0
    %854 = vmatpush1.msra.mxu0 0.0
    %855 = vmatprep.subr.mxu0 0.0
    %856 = vmatpush1.msra.mxu0 0.0
    %857 = vmatprep.subr.mxu0 0.0
    %858 = vmatpush1.msra.mxu0 0.0
    %859 = vmatprep.subr.mxu0 0.0
    %860 = vmatpush1.msra.mxu0 0.0
    %861 = vmatprep.subr.mxu0 0.0
    %862 = vmatpush1.msra.mxu0 0.0
    %863 = vmatprep.subr.mxu0 0.0
    %864 = vmatpush1.msra.mxu0 0.0
    %865 = vmatprep.subr.mxu0 0.0
    %866 = vmatpush1.msra.mxu0 0.0
    %867 = vmatprep.subr.mxu0 0.0
    %868 = vmatpush1.msra.mxu0 0.0
    %869 = vmatprep.subr.mxu0 0.0
    %870 = vmatpush1.msra.mxu0 0.0
    %871 = vmatprep.subr.mxu0 0.0
    %872 = vmatpush1.msra.mxu0 0.0
    %873 = vmatprep.subr.mxu0 0.0
    %874 = vmatpush1.msra.mxu0 0.0
    %875 = vmatprep.subr.mxu0 0.0
    %876 = vmatpush1.msra.mxu0 0.0
    %877 = vmatprep.subr.mxu0 0.0
    %878 = vmatpush1.msra.mxu0 0.0
    %879 = vmatprep.subr.mxu0 0.0
    %880 = vmatpush1.msra.mxu0 0.0
    %881 = vmatprep.subr.mxu0 0.0
    %882 = vmatpush1.msra.mxu0 0.0
    %883 = vmatprep.subr.mxu0 0.0
    %884 = vmatpush1.msra.mxu0 0.0
    %885 = vmatprep.subr.mxu0 0.0
    %886 = vmatpush1.msra.mxu0 0.0
    %887 = vmatprep.subr.mxu0 0.0
    %888 = vmatpush1.msra.mxu0 0.0
    %889 = vmatprep.subr.mxu0 0.0
    %890 = vmatpush1.msra.mxu0 0.0
    %891 = vmatprep.subr.mxu0 0.0
    %892 = vmatpush1.msra.mxu0 0.0
    %893 = vmatprep.subr.mxu0 0.0
    %894 = vmatpush1.msra.mxu0 0.0
    %895 = vmatprep.subr.mxu0 0.0
    %896 = vmatpush1.msra.mxu0 0.0
    %897 = vmatprep.subr.mxu0 0.0
    %898 = vmatpush1.msra.mxu0 0.0
    %899 = vmatprep.subr.mxu0 0.0
    %900 = vmatpush1.msra.mxu0 0.0
    %901 = vmatprep.subr.mxu0 0.0
    %902 = vmatpush1.msra.mxu0 0.0
    %903 = vmatprep.subr.mxu0 0.0
    %904 = vmatpush1.msra.mxu0 0.0
    %905 = vmatprep.mubr.f32.mxu0 0.0
    %906 = vmatmul.mubr.f32.gmra.mrb[0].mxu0 %v839
    %v907 = vpop.f32.mrb[0].mxu0
    %v908 = vadd.f32 0.0, %v907
    %v909 = vpop.f32.mrb[0].mxu0
    %910 = vdwg.mxu0
    %v911 = vadd.f32 %v136, %v908
    %v912 = vxor.u32 %v911, 2147483648
    %v913 = vmul.f32 %v912, 1.442695
    %v914 = vpow.pop %v913
    %v915 = vadd.f32 %v914, 1.0
    %v916 = vrcp.pop %v915
    %v917 = vmul.f32 1.0, %v916
    %v918 = vtanh.pop %v911
    %v919 = vmul.f32 %v917, %v829
    %921 = vrot.lane.b32.xlu0 %v918, 64
    %v922 = vpop.permute.xlu0 %921
    %v924 = vmul.f32 %v917, %v922
    %926 = vrot.lane.b32.xlu0 %v924, 32
    %v927 = vpop.permute.xlu0 %926
    %v929 = vadd.f32 %v919, %v927
    %v930 = vtanh.pop %v929
    %932 = vrot.lane.b32.xlu0 %v930, 64
    %v933 = vpop.permute.xlu0 %932
    %v935 = vmul.f32 %v917, %v933
    %v936 = vlaneseq
    %v937 = vshrl.u32 %v936, 7
    %v938 = vsub.s32 0, %v937
    %v939 = vrot.slane %v43, %v938
    %941 = vrot.lane.b32.xlu0 %v939, 96
    %v942 = vpop.permute.xlu0 %941
    %v944 = vmul.f32 %v935, %v942
    %946 = vrot.lane.b32.xlu0 %v944, 32
    %v947 = vpop.permute.xlu0 %946
    %vm949 = vcmask 254976
    %v950 = vsel %vm949, %v947, 0.0
    %951 = vadd.xlane.f32.xlu0 %v950
    %v952 = vpop.xlane.xlu0 %951
    %v953 = vlaneseq
    %v954 = vshrl.u32 %v953, 7
    %v955 = vsub.s32 0, %v954
    %v956 = vrot.slane %v44, %v955
    %v957 = vadd.f32 %v952, %v956
    %v958 = vxor.u32 %v957, 2147483648
    %v959 = vmul.f32 %v958, 1.442695
    %v960 = vpow.pop %v959
    %v961 = vadd.f32 %v960, 1.0
    %v962 = vrcp.pop %v961
    %v963 = vmul.f32 1.0, %v962
    %vm964 = vcmask 1024
    %965 = vst.msk [vmem:[%s2] sm:$0x3] %vm964, %v963
    // Predicated region
    $region18: #{forward.1} parent=1 // pred_check
      _
    $region19: #{forward.1} parent=1 // pred_check_branch
      %967 = sbr.rel (0) target = $region21
    $region20: #{forward.1} parent=1 // pred_region
      _
    $region21: #{forward.1} parent=1 // pred_fallthru
      _
    // Predicated region
    $region22: #{forward.1} parent=1 // pred_check
      _
    $region23: #{forward.1} parent=1 // pred_check_branch
      %969 = sbr.rel (0) target = $region25
    $region24: #{forward.1} parent=1 // pred_region
      _
    $region25: #{forward.1} parent=1 // pred_fallthru
      _
    %970 = vsyncpa [#allocation3], 1
    %971 = vsyncpa [#allocation5], 1

</llo_original>
